<compile_context>
chip_gen: v6e
topology: v6e:2x2x1
jax: 0.10.0
libtpu: 0.0.40
codegen_flags: <defaults>
</compile_context>

<pallas_src>
import functools

import jax
import jax.numpy as jnp
from jax import lax
from jax.experimental import pallas as pl
from jax.experimental.pallas import tpu as pltpu


# ------------------------------ small helpers ------------------------------ #

def _round_up(x: int, m: int) -> int:
    return ((x + m - 1) // m) * m


def _cdiv(a: int, b: int) -> int:
    return (a + b - 1) // b


def _pack_factor(d: int, out_lanes: int) -> int:
    """Rows packed per lane-dense output row (P*D == 256 or 128 when possible)."""
    for lanes in (out_lanes, 128):
        if d <= lanes and lanes % d == 0:
            return lanes // d
    return 1


def _split_f32_to_bf16_parts(w: jax.Array):
    """Exact 3-way bf16 split: hi + mid + lo == w (bit-exact in f32).

    Each residual is exactly representable in f32 and the final residual fits
    in bf16's 8-bit significand, so summing the three gathered parts in f32
    reconstructs the original f32 embedding row exactly.
    """
    w = w.astype(jnp.float32)
    hi = w.astype(jnp.bfloat16)
    r1 = w - hi.astype(jnp.float32)
    mid = r1.astype(jnp.bfloat16)
    r2 = r1 - mid.astype(jnp.float32)
    lo = r2.astype(jnp.bfloat16)
    return hi, mid, lo


# ----------------------------- Pallas kernel ------------------------------- #

def _gather_kernel(ids_ref, whi_ref, wmid_ref, wlo_ref, out_ref,
                   *, p, v, d, rs, n_sub):
    """Lane-dense embedding gather via per-slot one-hot bf16 matmuls.

    ids_ref  : (rows_step, P)    int32  token ids; token index = row*P + slot
    w*_ref   : (V, D)            bf16   exact 3-part split of the f32 table
    out_ref  : (rows_step, P*D)  f32    out[r, j*D:(j+1)*D] = table[ids[r, j]]
    """
    whi = whi_ref[...]
    wmid = wmid_ref[...]
    wlo = wlo_ref[...]
    # Hoisted out of the sub-tile loop (broadcast_in_dim is not CSE'd by JAX).
    col = lax.broadcasted_iota(jnp.int32, (rs, v), 1)

    def sub_tile(r0):
        ids = ids_ref[pl.ds(r0, rs), :]                      # (rs, P) int32
        pieces = []
        for j in range(p):                                   # static, P <= 8
            # Single compare + single cast per slot tile (minimal VALU work).
            oh = (col == ids[:, j:j + 1]).astype(jnp.bfloat16)   # (rs, V)
            acc = jnp.dot(oh, whi, preferred_element_type=jnp.float32)
            acc = acc + jnp.dot(oh, wmid, preferred_element_type=jnp.float32)
            acc = acc + jnp.dot(oh, wlo, preferred_element_type=jnp.float32)
            pieces.append(acc)                               # (rs, D) f32, exact
        # One full-width (256-lane) store per sub-tile; HBM writeback stays
        # lane-dense.
        out_ref[pl.ds(r0, rs), :] = jnp.concatenate(pieces, axis=-1)

    if n_sub == 1:
        sub_tile(0)
    else:
        def body(s, carry):
            sub_tile(pl.multiple_of(s * rs, rs))
            return carry
        lax.fori_loop(0, n_sub, body, 0, unroll=(n_sub <= 8))


@functools.partial(
    jax.jit,
    static_argnames=("vocab_size", "hidden", "tokens_per_step", "sub_rows",
                     "out_lanes"))
def embedding_lookup(ids_flat: jax.Array, weight_parts, *, vocab_size: int,
                     hidden: int, tokens_per_step: int = 8192,
                     sub_rows: int = 256, out_lanes: int = 256) -> jax.Array:
    """F.embedding(ids_flat, weight) -> [N, D] via a tiled one-hot MXU gather."""
    whi, wmid, wlo = weight_parts
    v, d = vocab_size, hidden
    n = int(ids_flat.shape[0])

    p = _pack_factor(d, out_lanes)                 # rows packed per output row

    # Bounds safety: F.embedding would raise on OOB ids; we clamp instead.
    ids = jnp.clip(ids_flat.astype(jnp.int32), 0, v - 1)

    # --- tiling ---------------------------------------------------------- #
    rows_needed = _cdiv(n, p)
    rows_cap = max(8, _round_up(max(tokens_per_step // p, 1), 8))
    rows_step = max(8, min(_round_up(rows_needed, 8), rows_cap))
    if rows_step > sub_rows:                       # bound live one-hot per sub-tile
        rows_step = _round_up(rows_step, sub_rows)
        rs = sub_rows
    else:
        rs = rows_step
    n_sub = rows_step // rs
    rows_total = _round_up(rows_needed, rows_step)
    grid = rows_total // rows_step

    # pad ids (pad value 0 is in range) and lay them out as (rows, P)
    ids = jnp.pad(ids, (0, rows_total * p - n)).reshape(rows_total, p)

    kernel = functools.partial(_gather_kernel, p=p, v=v, d=d, rs=rs, n_sub=n_sub)

    out_packed = pl.pallas_call(
        kernel,
        out_shape=jax.ShapeDtypeStruct((rows_total, p * d), jnp.float32),
        grid=(grid,),
        in_specs=[
            pl.BlockSpec((rows_step, p), lambda i: (i, 0)),   # id tile
            pl.BlockSpec((v, d), lambda i: (0, 0)),           # resident table (hi)
            pl.BlockSpec((v, d), lambda i: (0, 0)),           # resident table (mid)
            pl.BlockSpec((v, d), lambda i: (0, 0)),           # resident table (lo)
        ],
        out_specs=pl.BlockSpec((rows_step, p * d), lambda i: (i, 0)),  # lane-dense
        compiler_params=pltpu.CompilerParams(
            dimension_semantics=("parallel",)),
    )(ids, whi, wmid, wlo)

    # row-major unpack of the lane-packed rows, drop grid padding
    return out_packed.reshape(rows_total * p, d)[:n]


# ------------------------------- SemBed port -------------------------------- #

class SemBedJax:
    """JAX/Pallas port of SemBed (model_name in ['TaPas','BERT','RoBERTa'] path)."""

    def __init__(self, vocab_size: int = 64, hidden: int = 32, seed: int = 0):
        # Deterministic synthetic "encoder word embedding" weight.
        key = jax.random.PRNGKey(seed)
        self.embedding_weight = jax.random.normal(
            key, (vocab_size, hidden), dtype=jnp.float32)
        # Hoisted: exact bf16 3-part split, computed once per weight.
        self._weight_parts = _split_f32_to_bf16_parts(self.embedding_weight)
        self.vocab_size = vocab_size
        self.hidden = hidden

    # TODO(synk): BertTokenizer / RobertaTokenizer / GPT2 BPE string tokenization
    # has no Pallas/JAX equivalent; a deterministic char-level tokenizer stands in.
    def _tokenize(self, number: str):
        # one token per character, ids in [1, vocab_size) — 0 reserved for padding
        return [(ord(c) % (self.vocab_size - 1)) + 1 for c in number]

    def get_token_mapping(self, number_list):
        batch_token_mapping = []
        for number in number_list:
            clean_tokens = list(number)          # char-level tokens
            single_token_mapping = []
            for token_idx, token in enumerate(clean_tokens):
                single_token_mapping.extend([str(token_idx + 1)] * len(token))
            batch_token_mapping.append('|'.join(single_token_mapping))
        return batch_token_mapping

    def get_original_ids(self, number_list):
        return ['|'.join(map(str, self._tokenize(n))) for n in number_list]

    @staticmethod
    def _unpack_and_pad(prop_strings, pad_value: int = 0) -> jax.Array:
        # equivalent of unpack_and_pad_number_property: '|'-joined ints -> padded int tensor
        seqs = [[int(x) for x in s.split('|')] if s else [] for s in prop_strings]
        max_len = max(1, max(len(s) for s in seqs))
        arr = [s + [pad_value] * (max_len - len(s)) for s in seqs]
        return jnp.asarray(arr, dtype=jnp.int32)

    def forward(self, number_list):
        result = {}
        result['batch_token_mapping'] = self._unpack_and_pad(
            self.get_token_mapping(number_list))
        batch_original_ids = self._unpack_and_pad(
            self.get_original_ids(number_list))
        b, s = batch_original_ids.shape
        emb_flat = embedding_lookup(
            batch_original_ids.reshape(-1), self._weight_parts,
            vocab_size=self.vocab_size, hidden=self.hidden)
        result['batch_semantic_embedding'] = emb_flat.reshape(b, s, self.hidden)
        return result


# --------------------------------- driver ----------------------------------- #

if __name__ == "__main__":
    module = SemBedJax(vocab_size=64, hidden=32, seed=0)

    number_list = ["3.14159", "42"]           # batch=2 "number" strings
    out = module.forward(number_list)

    emb = jax.block_until_ready(out['batch_semantic_embedding'])
    mapping = jax.block_until_ready(out['batch_token_mapping'])

    # correctness check against plain-JAX embedding lookup (exact 3-part split
    # keeps the Pallas result bit-accurate vs the f32 table)
    ids_ref = module._unpack_and_pad(module.get_original_ids(number_list))
    ref = module.embedding_weight[ids_ref]    # [B, S, D]
    assert emb.shape == ref.shape, (emb.shape, ref.shape)
    assert mapping.dtype == jnp.int32
    assert jnp.allclose(emb, ref, rtol=1e-6, atol=1e-6), \
        "Pallas embedding gather mismatch"

    print("KERNEL_OK")
</pallas_src>

<mosaic_0001>
module attributes {stable_mosaic.version = 11 : i64} {
  func.func @_gather_kernel(%arg0: i32, %arg1: memref<8x8xi32, #tpu.memory_space<vmem>>, %arg2: memref<64x32xbf16, #tpu.memory_space<vmem>>, %arg3: memref<64x32xbf16, #tpu.memory_space<vmem>>, %arg4: memref<64x32xbf16, #tpu.memory_space<vmem>>, %arg5: memref<8x256xf32, #tpu.memory_space<vmem>>) attributes {dimension_semantics = [#tpu.dimension_semantics<parallel>], iteration_bounds = array<i64: 1>, scalar_prefetch = 0 : i64, scratch_operands = 0 : i64, tpu.core_type = #tpu.core_type<tc>, window_params = [{transform_indices = @transform_0, window_bounds = array<i64: 8, 8>}, {pipeline_mode = #tpu.pipeline_mode<synchronous>, transform_indices = @transform_1, window_bounds = array<i64: 64, 32>}, {pipeline_mode = #tpu.pipeline_mode<synchronous>, transform_indices = @transform_2, window_bounds = array<i64: 64, 32>}, {pipeline_mode = #tpu.pipeline_mode<synchronous>, transform_indices = @transform_3, window_bounds = array<i64: 64, 32>}, {transform_indices = @transform_4, window_bounds = array<i64: 8, 256>}]} {
    %c0 = arith.constant 0 : index
    %c0_0 = arith.constant 0 : index
    %0 = vector.load %arg2[%c0, %c0_0] : memref<64x32xbf16, #tpu.memory_space<vmem>>, vector<64x32xbf16>
    %c0_1 = arith.constant 0 : index
    %c0_2 = arith.constant 0 : index
    %1 = vector.load %arg3[%c0_1, %c0_2] : memref<64x32xbf16, #tpu.memory_space<vmem>>, vector<64x32xbf16>
    %c0_3 = arith.constant 0 : index
    %c0_4 = arith.constant 0 : index
    %2 = vector.load %arg4[%c0_3, %c0_4] : memref<64x32xbf16, #tpu.memory_space<vmem>>, vector<64x32xbf16>
    %3 = tpu.iota {dimensions = array<i32: 1>} : vector<8x64xi32>
    %c0_5 = arith.constant 0 : index
    %c0_6 = arith.constant 0 : index
    %4 = vector.load %arg1[%c0_5, %c0_6] : memref<8x8xi32, #tpu.memory_space<vmem>>, vector<8x8xi32>
    %5 = vector.extract_strided_slice %4 {offsets = [0, 0], sizes = [8, 1], strides = [1, 1]} : vector<8x8xi32> to vector<8x1xi32>
    %6 = vector.broadcast %5 : vector<8x1xi32> to vector<8x64xi32>
    %7 = arith.cmpi eq, %3, %6 : vector<8x64xi32>
    %8 = arith.extui %7 : vector<8x64xi1> to vector<8x64xi32>
    %9 = arith.sitofp %8 : vector<8x64xi32> to vector<8x64xf32>
    %10 = arith.truncf %9 : vector<8x64xf32> to vector<8x64xbf16>
    %cst = arith.constant dense<0.000000e+00> : vector<8x32xf32>
    %11 = tpu.matmul %10, %0, %cst {dimension_numbers = #tpu.dot_dimension_numbers<[1], [0], [0], [1], [0, 0, 1, 1], [], []>} : vector<8x64xbf16>, vector<64x32xbf16>, vector<8x32xf32> -> vector<8x32xf32>
    %cst_7 = arith.constant dense<0.000000e+00> : vector<8x32xf32>
    %12 = tpu.matmul %10, %1, %cst_7 {dimension_numbers = #tpu.dot_dimension_numbers<[1], [0], [0], [1], [0, 0, 1, 1], [], []>} : vector<8x64xbf16>, vector<64x32xbf16>, vector<8x32xf32> -> vector<8x32xf32>
    %13 = arith.addf %11, %12 : vector<8x32xf32>
    %cst_8 = arith.constant dense<0.000000e+00> : vector<8x32xf32>
    %14 = tpu.matmul %10, %2, %cst_8 {dimension_numbers = #tpu.dot_dimension_numbers<[1], [0], [0], [1], [0, 0, 1, 1], [], []>} : vector<8x64xbf16>, vector<64x32xbf16>, vector<8x32xf32> -> vector<8x32xf32>
    %15 = arith.addf %13, %14 : vector<8x32xf32>
    %16 = vector.extract_strided_slice %4 {offsets = [0, 1], sizes = [8, 1], strides = [1, 1]} : vector<8x8xi32> to vector<8x1xi32>
    %17 = vector.broadcast %16 : vector<8x1xi32> to vector<8x64xi32>
    %18 = arith.cmpi eq, %3, %17 : vector<8x64xi32>
    %19 = arith.extui %18 : vector<8x64xi1> to vector<8x64xi32>
    %20 = arith.sitofp %19 : vector<8x64xi32> to vector<8x64xf32>
    %21 = arith.truncf %20 : vector<8x64xf32> to vector<8x64xbf16>
    %cst_9 = arith.constant dense<0.000000e+00> : vector<8x32xf32>
    %22 = tpu.matmul %21, %0, %cst_9 {dimension_numbers = #tpu.dot_dimension_numbers<[1], [0], [0], [1], [0, 0, 1, 1], [], []>} : vector<8x64xbf16>, vector<64x32xbf16>, vector<8x32xf32> -> vector<8x32xf32>
    %cst_10 = arith.constant dense<0.000000e+00> : vector<8x32xf32>
    %23 = tpu.matmul %21, %1, %cst_10 {dimension_numbers = #tpu.dot_dimension_numbers<[1], [0], [0], [1], [0, 0, 1, 1], [], []>} : vector<8x64xbf16>, vector<64x32xbf16>, vector<8x32xf32> -> vector<8x32xf32>
    %24 = arith.addf %22, %23 : vector<8x32xf32>
    %cst_11 = arith.constant dense<0.000000e+00> : vector<8x32xf32>
    %25 = tpu.matmul %21, %2, %cst_11 {dimension_numbers = #tpu.dot_dimension_numbers<[1], [0], [0], [1], [0, 0, 1, 1], [], []>} : vector<8x64xbf16>, vector<64x32xbf16>, vector<8x32xf32> -> vector<8x32xf32>
    %26 = arith.addf %24, %25 : vector<8x32xf32>
    %27 = vector.extract_strided_slice %4 {offsets = [0, 2], sizes = [8, 1], strides = [1, 1]} : vector<8x8xi32> to vector<8x1xi32>
    %28 = vector.broadcast %27 : vector<8x1xi32> to vector<8x64xi32>
    %29 = arith.cmpi eq, %3, %28 : vector<8x64xi32>
    %30 = arith.extui %29 : vector<8x64xi1> to vector<8x64xi32>
    %31 = arith.sitofp %30 : vector<8x64xi32> to vector<8x64xf32>
    %32 = arith.truncf %31 : vector<8x64xf32> to vector<8x64xbf16>
    %cst_12 = arith.constant dense<0.000000e+00> : vector<8x32xf32>
    %33 = tpu.matmul %32, %0, %cst_12 {dimension_numbers = #tpu.dot_dimension_numbers<[1], [0], [0], [1], [0, 0, 1, 1], [], []>} : vector<8x64xbf16>, vector<64x32xbf16>, vector<8x32xf32> -> vector<8x32xf32>
    %cst_13 = arith.constant dense<0.000000e+00> : vector<8x32xf32>
    %34 = tpu.matmul %32, %1, %cst_13 {dimension_numbers = #tpu.dot_dimension_numbers<[1], [0], [0], [1], [0, 0, 1, 1], [], []>} : vector<8x64xbf16>, vector<64x32xbf16>, vector<8x32xf32> -> vector<8x32xf32>
    %35 = arith.addf %33, %34 : vector<8x32xf32>
    %cst_14 = arith.constant dense<0.000000e+00> : vector<8x32xf32>
    %36 = tpu.matmul %32, %2, %cst_14 {dimension_numbers = #tpu.dot_dimension_numbers<[1], [0], [0], [1], [0, 0, 1, 1], [], []>} : vector<8x64xbf16>, vector<64x32xbf16>, vector<8x32xf32> -> vector<8x32xf32>
    %37 = arith.addf %35, %36 : vector<8x32xf32>
    %38 = vector.extract_strided_slice %4 {offsets = [0, 3], sizes = [8, 1], strides = [1, 1]} : vector<8x8xi32> to vector<8x1xi32>
    %39 = vector.broadcast %38 : vector<8x1xi32> to vector<8x64xi32>
    %40 = arith.cmpi eq, %3, %39 : vector<8x64xi32>
    %41 = arith.extui %40 : vector<8x64xi1> to vector<8x64xi32>
    %42 = arith.sitofp %41 : vector<8x64xi32> to vector<8x64xf32>
    %43 = arith.truncf %42 : vector<8x64xf32> to vector<8x64xbf16>
    %cst_15 = arith.constant dense<0.000000e+00> : vector<8x32xf32>
    %44 = tpu.matmul %43, %0, %cst_15 {dimension_numbers = #tpu.dot_dimension_numbers<[1], [0], [0], [1], [0, 0, 1, 1], [], []>} : vector<8x64xbf16>, vector<64x32xbf16>, vector<8x32xf32> -> vector<8x32xf32>
    %cst_16 = arith.constant dense<0.000000e+00> : vector<8x32xf32>
    %45 = tpu.matmul %43, %1, %cst_16 {dimension_numbers = #tpu.dot_dimension_numbers<[1], [0], [0], [1], [0, 0, 1, 1], [], []>} : vector<8x64xbf16>, vector<64x32xbf16>, vector<8x32xf32> -> vector<8x32xf32>
    %46 = arith.addf %44, %45 : vector<8x32xf32>
    %cst_17 = arith.constant dense<0.000000e+00> : vector<8x32xf32>
    %47 = tpu.matmul %43, %2, %cst_17 {dimension_numbers = #tpu.dot_dimension_numbers<[1], [0], [0], [1], [0, 0, 1, 1], [], []>} : vector<8x64xbf16>, vector<64x32xbf16>, vector<8x32xf32> -> vector<8x32xf32>
    %48 = arith.addf %46, %47 : vector<8x32xf32>
    %49 = vector.extract_strided_slice %4 {offsets = [0, 4], sizes = [8, 1], strides = [1, 1]} : vector<8x8xi32> to vector<8x1xi32>
    %50 = vector.broadcast %49 : vector<8x1xi32> to vector<8x64xi32>
    %51 = arith.cmpi eq, %3, %50 : vector<8x64xi32>
    %52 = arith.extui %51 : vector<8x64xi1> to vector<8x64xi32>
    %53 = arith.sitofp %52 : vector<8x64xi32> to vector<8x64xf32>
    %54 = arith.truncf %53 : vector<8x64xf32> to vector<8x64xbf16>
    %cst_18 = arith.constant dense<0.000000e+00> : vector<8x32xf32>
    %55 = tpu.matmul %54, %0, %cst_18 {dimension_numbers = #tpu.dot_dimension_numbers<[1], [0], [0], [1], [0, 0, 1, 1], [], []>} : vector<8x64xbf16>, vector<64x32xbf16>, vector<8x32xf32> -> vector<8x32xf32>
    %cst_19 = arith.constant dense<0.000000e+00> : vector<8x32xf32>
    %56 = tpu.matmul %54, %1, %cst_19 {dimension_numbers = #tpu.dot_dimension_numbers<[1], [0], [0], [1], [0, 0, 1, 1], [], []>} : vector<8x64xbf16>, vector<64x32xbf16>, vector<8x32xf32> -> vector<8x32xf32>
    %57 = arith.addf %55, %56 : vector<8x32xf32>
    %cst_20 = arith.constant dense<0.000000e+00> : vector<8x32xf32>
    %58 = tpu.matmul %54, %2, %cst_20 {dimension_numbers = #tpu.dot_dimension_numbers<[1], [0], [0], [1], [0, 0, 1, 1], [], []>} : vector<8x64xbf16>, vector<64x32xbf16>, vector<8x32xf32> -> vector<8x32xf32>
    %59 = arith.addf %57, %58 : vector<8x32xf32>
    %60 = vector.extract_strided_slice %4 {offsets = [0, 5], sizes = [8, 1], strides = [1, 1]} : vector<8x8xi32> to vector<8x1xi32>
    %61 = vector.broadcast %60 : vector<8x1xi32> to vector<8x64xi32>
    %62 = arith.cmpi eq, %3, %61 : vector<8x64xi32>
    %63 = arith.extui %62 : vector<8x64xi1> to vector<8x64xi32>
    %64 = arith.sitofp %63 : vector<8x64xi32> to vector<8x64xf32>
    %65 = arith.truncf %64 : vector<8x64xf32> to vector<8x64xbf16>
    %cst_21 = arith.constant dense<0.000000e+00> : vector<8x32xf32>
    %66 = tpu.matmul %65, %0, %cst_21 {dimension_numbers = #tpu.dot_dimension_numbers<[1], [0], [0], [1], [0, 0, 1, 1], [], []>} : vector<8x64xbf16>, vector<64x32xbf16>, vector<8x32xf32> -> vector<8x32xf32>
    %cst_22 = arith.constant dense<0.000000e+00> : vector<8x32xf32>
    %67 = tpu.matmul %65, %1, %cst_22 {dimension_numbers = #tpu.dot_dimension_numbers<[1], [0], [0], [1], [0, 0, 1, 1], [], []>} : vector<8x64xbf16>, vector<64x32xbf16>, vector<8x32xf32> -> vector<8x32xf32>
    %68 = arith.addf %66, %67 : vector<8x32xf32>
    %cst_23 = arith.constant dense<0.000000e+00> : vector<8x32xf32>
    %69 = tpu.matmul %65, %2, %cst_23 {dimension_numbers = #tpu.dot_dimension_numbers<[1], [0], [0], [1], [0, 0, 1, 1], [], []>} : vector<8x64xbf16>, vector<64x32xbf16>, vector<8x32xf32> -> vector<8x32xf32>
    %70 = arith.addf %68, %69 : vector<8x32xf32>
    %71 = vector.extract_strided_slice %4 {offsets = [0, 6], sizes = [8, 1], strides = [1, 1]} : vector<8x8xi32> to vector<8x1xi32>
    %72 = vector.broadcast %71 : vector<8x1xi32> to vector<8x64xi32>
    %73 = arith.cmpi eq, %3, %72 : vector<8x64xi32>
    %74 = arith.extui %73 : vector<8x64xi1> to vector<8x64xi32>
    %75 = arith.sitofp %74 : vector<8x64xi32> to vector<8x64xf32>
    %76 = arith.truncf %75 : vector<8x64xf32> to vector<8x64xbf16>
    %cst_24 = arith.constant dense<0.000000e+00> : vector<8x32xf32>
    %77 = tpu.matmul %76, %0, %cst_24 {dimension_numbers = #tpu.dot_dimension_numbers<[1], [0], [0], [1], [0, 0, 1, 1], [], []>} : vector<8x64xbf16>, vector<64x32xbf16>, vector<8x32xf32> -> vector<8x32xf32>
    %cst_25 = arith.constant dense<0.000000e+00> : vector<8x32xf32>
    %78 = tpu.matmul %76, %1, %cst_25 {dimension_numbers = #tpu.dot_dimension_numbers<[1], [0], [0], [1], [0, 0, 1, 1], [], []>} : vector<8x64xbf16>, vector<64x32xbf16>, vector<8x32xf32> -> vector<8x32xf32>
    %79 = arith.addf %77, %78 : vector<8x32xf32>
    %cst_26 = arith.constant dense<0.000000e+00> : vector<8x32xf32>
    %80 = tpu.matmul %76, %2, %cst_26 {dimension_numbers = #tpu.dot_dimension_numbers<[1], [0], [0], [1], [0, 0, 1, 1], [], []>} : vector<8x64xbf16>, vector<64x32xbf16>, vector<8x32xf32> -> vector<8x32xf32>
    %81 = arith.addf %79, %80 : vector<8x32xf32>
    %82 = vector.extract_strided_slice %4 {offsets = [0, 7], sizes = [8, 1], strides = [1, 1]} : vector<8x8xi32> to vector<8x1xi32>
    %83 = vector.broadcast %82 : vector<8x1xi32> to vector<8x64xi32>
    %84 = arith.cmpi eq, %3, %83 : vector<8x64xi32>
    %85 = arith.extui %84 : vector<8x64xi1> to vector<8x64xi32>
    %86 = arith.sitofp %85 : vector<8x64xi32> to vector<8x64xf32>
    %87 = arith.truncf %86 : vector<8x64xf32> to vector<8x64xbf16>
    %cst_27 = arith.constant dense<0.000000e+00> : vector<8x32xf32>
    %88 = tpu.matmul %87, %0, %cst_27 {dimension_numbers = #tpu.dot_dimension_numbers<[1], [0], [0], [1], [0, 0, 1, 1], [], []>} : vector<8x64xbf16>, vector<64x32xbf16>, vector<8x32xf32> -> vector<8x32xf32>
    %cst_28 = arith.constant dense<0.000000e+00> : vector<8x32xf32>
    %89 = tpu.matmul %87, %1, %cst_28 {dimension_numbers = #tpu.dot_dimension_numbers<[1], [0], [0], [1], [0, 0, 1, 1], [], []>} : vector<8x64xbf16>, vector<64x32xbf16>, vector<8x32xf32> -> vector<8x32xf32>
    %90 = arith.addf %88, %89 : vector<8x32xf32>
    %cst_29 = arith.constant dense<0.000000e+00> : vector<8x32xf32>
    %91 = tpu.matmul %87, %2, %cst_29 {dimension_numbers = #tpu.dot_dimension_numbers<[1], [0], [0], [1], [0, 0, 1, 1], [], []>} : vector<8x64xbf16>, vector<64x32xbf16>, vector<8x32xf32> -> vector<8x32xf32>
    %92 = arith.addf %90, %91 : vector<8x32xf32>
    %93 = tpu.concatenate %15, %26, %37, %48, %59, %70, %81, %92 in 1 : vector<8x32xf32>, vector<8x32xf32>, vector<8x32xf32>, vector<8x32xf32>, vector<8x32xf32>, vector<8x32xf32>, vector<8x32xf32>, vector<8x32xf32> -> vector<8x256xf32>
    %c0_30 = arith.constant 0 : index
    %c0_31 = arith.constant 0 : index
    %94 = vector.load %arg5[%c0_30, %c0_31] : memref<8x256xf32, #tpu.memory_space<vmem>>, vector<8x256xf32>
    tpu.vector_store %arg5[%c0_30, %c0_31], %93 {strides = array<i32>} : memref<8x256xf32, #tpu.memory_space<vmem>>, vector<8x256xf32>,
    return
  }
  func.func @transform_0(%arg0: i32) -> (i32, i32) {
    %c0_i32 = arith.constant 0 : i32
    %c0_i32_0 = arith.constant 0 : i32
    return %arg0, %c0_i32 : i32, i32
  }
  func.func @transform_1(%arg0: i32) -> (i32, i32) {
    %c0_i32 = arith.constant 0 : i32
    %c0_i32_0 = arith.constant 0 : i32
    %c0_i32_1 = arith.constant 0 : i32
    return %c0_i32, %c0_i32_0 : i32, i32
  }
  func.func @transform_2(%arg0: i32) -> (i32, i32) {
    %c0_i32 = arith.constant 0 : i32
    %c0_i32_0 = arith.constant 0 : i32
    %c0_i32_1 = arith.constant 0 : i32
    return %c0_i32, %c0_i32_0 : i32, i32
  }
  func.func @transform_3(%arg0: i32) -> (i32, i32) {
    %c0_i32 = arith.constant 0 : i32
    %c0_i32_0 = arith.constant 0 : i32
    %c0_i32_1 = arith.constant 0 : i32
    return %c0_i32, %c0_i32_0 : i32, i32
  }
  func.func @transform_4(%arg0: i32) -> (i32, i32) {
    %c0_i32 = arith.constant 0 : i32
    %c0_i32_0 = arith.constant 0 : i32
    return %arg0, %c0_i32 : i32, i32
  }
}

</mosaic_0001>

<llo_original>
// kernel: embedding_lookup.1
$region0: #{embedding_lookup.1}
  #allocation0 [shape = 'u32[]', space=smem, size = 0x4, offset = 0x4, fixed_abs, tag = 'smem constant byte address 0x4 - core index']
  #allocation1 [shape = 'u32[144,128]{1,0:T(1,128)}', space=vmem, size = 0x12000, scoped, tag = 'internal scratch']
  %s0 = inlined_call_operand.vmem [shape: s32[8,8], index: 0, kind: input, shape index: {}]
  %s1 = inlined_call_operand.vmem [shape: bf16[64,32], index: 1, kind: input, shape index: {}]
  %s2 = inlined_call_operand.vmem [shape: bf16[64,32], index: 2, kind: input, shape index: {}]
  %s3 = inlined_call_operand.vmem [shape: bf16[64,32], index: 3, kind: input, shape index: {}]
  %s4 = inlined_call_operand.vmem [shape: f32[8,256], index: 4, kind: output, shape index: {}]
  %s5 = sld [smem:[#allocation0]]
  $region26: #{embedding_lookup.1} parent=0
    _
  %s7 = ssub.s32 1, %s5
  %s8 = scalar_select 0, %s7, %s5
  // Predicated region
  $region2: #{embedding_lookup.1} parent=0 // pred_check
    _
  $region3: #{embedding_lookup.1} parent=0 // pred_check_branch
    %10 = sbr.rel (0) target = $region5
  $region4: #{embedding_lookup.1} parent=0 // pred_region
    _
  $region5: #{embedding_lookup.1} parent=0 // pred_fallthru
    _
  // Predicated region
  $region6: #{embedding_lookup.1} parent=0 // pred_check
    _
  $region7: #{embedding_lookup.1} parent=0 // pred_check_branch
    %12 = sbr.rel (0) target = $region9
  $region8: #{embedding_lookup.1} parent=0 // pred_region
    _
  $region9: #{embedding_lookup.1} parent=0 // pred_fallthru
    _
  // Predicated region
  $region10: #{embedding_lookup.1} parent=0 // pred_check
    _
  $region11: #{embedding_lookup.1} parent=0 // pred_check_branch
    %14 = sbr.rel (0) target = $region13
  $region12: #{embedding_lookup.1} parent=0 // pred_region
    _
  $region13: #{embedding_lookup.1} parent=0 // pred_fallthru
    _
  // Predicated region
  $region14: #{embedding_lookup.1} parent=0 // pred_check
    _
  $region15: #{embedding_lookup.1} parent=0 // pred_check_branch
    %16 = sbr.rel (0) target = $region17
  $region16: #{embedding_lookup.1} parent=0 // pred_region
    _
  $region17: #{embedding_lookup.1} parent=0 // pred_fallthru
    _
  %v18 = vld [vmem:[%s1] sm:$0xf]
  %v19 = vld [vmem:[%s1 + $0x4] sm:$0xf]
  %v20 = vld [vmem:[%s1 + $0x8] sm:$0xf]
  %v21 = vld [vmem:[%s1 + $0xc] sm:$0xf]
  %v22 = vld [vmem:[%s1 + $0x10] sm:$0xf]
  %v23 = vld [vmem:[%s1 + $0x14] sm:$0xf]
  %v24 = vld [vmem:[%s1 + $0x18] sm:$0xf]
  %v25 = vld [vmem:[%s1 + $0x1c] sm:$0xf]
  %v26 = vld [vmem:[%s2] sm:$0xf]
  %v27 = vld [vmem:[%s2 + $0x4] sm:$0xf]
  %v28 = vld [vmem:[%s2 + $0x8] sm:$0xf]
  %v29 = vld [vmem:[%s2 + $0xc] sm:$0xf]
  %v30 = vld [vmem:[%s2 + $0x10] sm:$0xf]
  %v31 = vld [vmem:[%s2 + $0x14] sm:$0xf]
  %v32 = vld [vmem:[%s2 + $0x18] sm:$0xf]
  %v33 = vld [vmem:[%s2 + $0x1c] sm:$0xf]
  %v34 = vld [vmem:[%s3] sm:$0xf]
  %v35 = vld [vmem:[%s3 + $0x4] sm:$0xf]
  %v36 = vld [vmem:[%s3 + $0x8] sm:$0xf]
  %v37 = vld [vmem:[%s3 + $0xc] sm:$0xf]
  %v38 = vld [vmem:[%s3 + $0x10] sm:$0xf]
  %v39 = vld [vmem:[%s3 + $0x14] sm:$0xf]
  %v40 = vld [vmem:[%s3 + $0x18] sm:$0xf]
  %v41 = vld [vmem:[%s3 + $0x1c] sm:$0xf]
  %v42 = vlaneseq
  %v43 = vand.u32 %v42, 127
  %v44 = vld [vmem:[%s0] sm:$0xff]
  %45 = vset.pattern.permute.xlu0 0
  %46 = vperm.xlu0 %45, %v44
  %v47 = vpop.permute.xlu0 %46
  %vm48 = vcmp.eq.s32.totalorder %v43, %v47
  %v49 = vsel %vm48, 1, 0
  %v50 = vcvt.s32.f32 %v49
  %v51 = vpack.c.bf16 %v50, %v50
  %v60 = vunpack.c.l.b16 %v26
  %v61 = vunpack.c.l.b16 %v27
  %v62 = vunpack.c.l.b16 %v28
  %v63 = vunpack.c.l.b16 %v29
  %v64 = vunpack.c.l.b16 %v30
  %v65 = vunpack.c.l.b16 %v31
  %v66 = vunpack.c.l.b16 %v32
  %v67 = vunpack.c.l.b16 %v33
  %v68 = vpack.c.b16 %v61, %v60
  %v69 = vpack.c.b16 %v63, %v62
  %v70 = vpack.c.b16 %v65, %v64
  %v71 = vpack.c.b16 %v67, %v66
  %vm76 = vcmask 523264
  %v78 = vsel %vm76, %v51, 0
  %80 = vmatprep.subr.bf16.mxu0 0
  %81 = vmatpush1.bf16.msra.mxu0 0
  %82 = vmatprep.subr.bf16.mxu0 0
  %83 = vmatpush1.bf16.msra.mxu0 0
  %84 = vmatprep.subr.bf16.mxu0 0
  %85 = vmatpush1.bf16.msra.mxu0 0
  %86 = vmatprep.subr.bf16.mxu0 0
  %87 = vmatpush1.bf16.msra.mxu0 0
  %88 = vmatprep.subr.bf16.mxu0 0
  %89 = vmatpush1.bf16.msra.mxu0 %v71
  %90 = vmatprep.subr.bf16.mxu0 0
  %91 = vmatpush1.bf16.msra.mxu0 %v70
  %92 = vmatprep.subr.bf16.mxu0 0
  %93 = vmatpush1.bf16.msra.mxu0 %v69
  %94 = vmatprep.subr.bf16.mxu0 0
  %95 = vmatpush1.bf16.msra.mxu0 %v68
  %96 = vmatprep.subr.bf16.mxu0 0
  %97 = vmatpush2.bf16.msra.mxu0 0
  %98 = vmatprep.subr.bf16.mxu0 0
  %99 = vmatpush2.bf16.msra.mxu0 0
  %100 = vmatprep.subr.bf16.mxu0 0
  %101 = vmatpush2.bf16.msra.mxu0 0
  %102 = vmatprep.subr.bf16.mxu0 0
  %103 = vmatpush2.bf16.msra.mxu0 0
  %104 = vmatprep.subr.bf16.mxu0 0
  %105 = vmatpush2.bf16.msra.mxu0 0
  %106 = vmatprep.subr.bf16.mxu0 0
  %107 = vmatpush2.bf16.msra.mxu0 0
  %108 = vmatprep.subr.bf16.mxu0 0
  %109 = vmatpush2.bf16.msra.mxu0 0
  %110 = vmatprep.subr.bf16.mxu0 0
  %111 = vmatpush2.bf16.msra.mxu0 0
  %112 = vmatprep.mubr.bf16.mxu0 0
  %113 = vmatmul.mubr.bf16.gmra.mxu0 %v78
  %v114 = vpop.f32.mrf.mxu0
  %v115 = vadd.f32 0.0, %v114
  %v116 = vpop.f32.mrf.mxu0
  %v117 = vpop.f32.mrf.mxu0
  %v118 = vpop.f32.mrf.mxu0
  %119 = vdwg.mxu0
  %v128 = vunpack.c.l.b16 %v18
  %v129 = vunpack.c.l.b16 %v19
  %v130 = vunpack.c.l.b16 %v20
  %v131 = vunpack.c.l.b16 %v21
  %v132 = vunpack.c.l.b16 %v22
  %v133 = vunpack.c.l.b16 %v23
  %v134 = vunpack.c.l.b16 %v24
  %v135 = vunpack.c.l.b16 %v25
  %v136 = vpack.c.b16 %v129, %v128
  %v137 = vpack.c.b16 %v131, %v130
  %v138 = vpack.c.b16 %v133, %v132
  %v139 = vpack.c.b16 %v135, %v134
  %144 = vmatprep.subr.bf16.mxu0 0
  %145 = vmatpush1.bf16.msra.mxu0 0
  %146 = vmatprep.subr.bf16.mxu0 0
  %147 = vmatpush1.bf16.msra.mxu0 0
  %148 = vmatprep.subr.bf16.mxu0 0
  %149 = vmatpush1.bf16.msra.mxu0 0
  %150 = vmatprep.subr.bf16.mxu0 0
  %151 = vmatpush1.bf16.msra.mxu0 0
  %152 = vmatprep.subr.bf16.mxu0 0
  %153 = vmatpush1.bf16.msra.mxu0 %v139
  %154 = vmatprep.subr.bf16.mxu0 0
  %155 = vmatpush1.bf16.msra.mxu0 %v138
  %156 = vmatprep.subr.bf16.mxu0 0
  %157 = vmatpush1.bf16.msra.mxu0 %v137
  %158 = vmatprep.subr.bf16.mxu0 0
  %159 = vmatpush1.bf16.msra.mxu0 %v136
  %160 = vmatprep.subr.bf16.mxu0 0
  %161 = vmatpush2.bf16.msra.mxu0 0
  %162 = vmatprep.subr.bf16.mxu0 0
  %163 = vmatpush2.bf16.msra.mxu0 0
  %164 = vmatprep.subr.bf16.mxu0 0
  %165 = vmatpush2.bf16.msra.mxu0 0
  %166 = vmatprep.subr.bf16.mxu0 0
  %167 = vmatpush2.bf16.msra.mxu0 0
  %168 = vmatprep.subr.bf16.mxu0 0
  %169 = vmatpush2.bf16.msra.mxu0 0
  %170 = vmatprep.subr.bf16.mxu0 0
  %171 = vmatpush2.bf16.msra.mxu0 0
  %172 = vmatprep.subr.bf16.mxu0 0
  %173 = vmatpush2.bf16.msra.mxu0 0
  %174 = vmatprep.subr.bf16.mxu0 0
  %175 = vmatpush2.bf16.msra.mxu0 0
  %176 = vmatprep.mubr.bf16.mxu0 0
  %177 = vmatmul.mubr.bf16.gmra.mxu0 %v78
  %v178 = vpop.f32.mrf.mxu0
  %v179 = vadd.f32 %v115, %v178
  %v180 = vpop.f32.mrf.mxu0
  %v181 = vpop.f32.mrf.mxu0
  %v182 = vpop.f32.mrf.mxu0
  %183 = vdwg.mxu0
  %v192 = vunpack.c.l.b16 %v34
  %v193 = vunpack.c.l.b16 %v35
  %v194 = vunpack.c.l.b16 %v36
  %v195 = vunpack.c.l.b16 %v37
  %v196 = vunpack.c.l.b16 %v38
  %v197 = vunpack.c.l.b16 %v39
  %v198 = vunpack.c.l.b16 %v40
  %v199 = vunpack.c.l.b16 %v41
  %v200 = vpack.c.b16 %v193, %v192
  %v201 = vpack.c.b16 %v195, %v194
  %v202 = vpack.c.b16 %v197, %v196
  %v203 = vpack.c.b16 %v199, %v198
  %208 = vmatprep.subr.bf16.mxu0 0
  %209 = vmatpush1.bf16.msra.mxu0 0
  %210 = vmatprep.subr.bf16.mxu0 0
  %211 = vmatpush1.bf16.msra.mxu0 0
  %212 = vmatprep.subr.bf16.mxu0 0
  %213 = vmatpush1.bf16.msra.mxu0 0
  %214 = vmatprep.subr.bf16.mxu0 0
  %215 = vmatpush1.bf16.msra.mxu0 0
  %216 = vmatprep.subr.bf16.mxu0 0
  %217 = vmatpush1.bf16.msra.mxu0 %v203
  %218 = vmatprep.subr.bf16.mxu0 0
  %219 = vmatpush1.bf16.msra.mxu0 %v202
  %220 = vmatprep.subr.bf16.mxu0 0
  %221 = vmatpush1.bf16.msra.mxu0 %v201
  %222 = vmatprep.subr.bf16.mxu0 0
  %223 = vmatpush1.bf16.msra.mxu0 %v200
  %224 = vmatprep.subr.bf16.mxu0 0
  %225 = vmatpush2.bf16.msra.mxu0 0
  %226 = vmatprep.subr.bf16.mxu0 0
  %227 = vmatpush2.bf16.msra.mxu0 0
  %228 = vmatprep.subr.bf16.mxu0 0
  %229 = vmatpush2.bf16.msra.mxu0 0
  %230 = vmatprep.subr.bf16.mxu0 0
  %231 = vmatpush2.bf16.msra.mxu0 0
  %232 = vmatprep.subr.bf16.mxu0 0
  %233 = vmatpush2.bf16.msra.mxu0 0
  %234 = vmatprep.subr.bf16.mxu0 0
  %235 = vmatpush2.bf16.msra.mxu0 0
  %236 = vmatprep.subr.bf16.mxu0 0
  %237 = vmatpush2.bf16.msra.mxu0 0
  %238 = vmatprep.subr.bf16.mxu0 0
  %239 = vmatpush2.bf16.msra.mxu0 0
  %240 = vmatprep.mubr.bf16.mxu0 0
  %241 = vmatmul.mubr.bf16.gmra.mxu0 %v78
  %v242 = vpop.f32.mrf.mxu0
  %v243 = vadd.f32 0.0, %v242
  %v244 = vpop.f32.mrf.mxu0
  %v245 = vpop.f32.mrf.mxu0
  %v246 = vpop.f32.mrf.mxu0
  %247 = vdwg.mxu0
  %v248 = vadd.f32 %v179, %v243
  %249 = vset.pattern.permute.xlu0 1
  %250 = vperm.xlu0 %249, %v44
  %v251 = vpop.permute.xlu0 %250
  %vm252 = vcmp.eq.s32.totalorder %v43, %v251
  %v253 = vsel %vm252, 1, 0
  %v254 = vcvt.s32.f32 %v253
  %v255 = vpack.c.bf16 %v254, %v254
  %v257 = vsel %vm76, %v255, 0
  %259 = vmatprep.subr.bf16.mxu0 0
  %260 = vmatpush1.bf16.msra.mxu0 0
  %261 = vmatprep.subr.bf16.mxu0 0
  %262 = vmatpush1.bf16.msra.mxu0 0
  %263 = vmatprep.subr.bf16.mxu0 0
  %264 = vmatpush1.bf16.msra.mxu0 0
  %265 = vmatprep.subr.bf16.mxu0 0
  %266 = vmatpush1.bf16.msra.mxu0 0
  %267 = vmatprep.subr.bf16.mxu0 0
  %268 = vmatpush1.bf16.msra.mxu0 %v71
  %269 = vmatprep.subr.bf16.mxu0 0
  %270 = vmatpush1.bf16.msra.mxu0 %v70
  %271 = vmatprep.subr.bf16.mxu0 0
  %272 = vmatpush1.bf16.msra.mxu0 %v69
  %273 = vmatprep.subr.bf16.mxu0 0
  %274 = vmatpush1.bf16.msra.mxu0 %v68
  %275 = vmatprep.subr.bf16.mxu0 0
  %276 = vmatpush2.bf16.msra.mxu0 0
  %277 = vmatprep.subr.bf16.mxu0 0
  %278 = vmatpush2.bf16.msra.mxu0 0
  %279 = vmatprep.subr.bf16.mxu0 0
  %280 = vmatpush2.bf16.msra.mxu0 0
  %281 = vmatprep.subr.bf16.mxu0 0
  %282 = vmatpush2.bf16.msra.mxu0 0
  %283 = vmatprep.subr.bf16.mxu0 0
  %284 = vmatpush2.bf16.msra.mxu0 0
  %285 = vmatprep.subr.bf16.mxu0 0
  %286 = vmatpush2.bf16.msra.mxu0 0
  %287 = vmatprep.subr.bf16.mxu0 0
  %288 = vmatpush2.bf16.msra.mxu0 0
  %289 = vmatprep.subr.bf16.mxu0 0
  %290 = vmatpush2.bf16.msra.mxu0 0
  %291 = vmatprep.mubr.bf16.mxu0 0
  %292 = vmatmul.mubr.bf16.gmra.mxu0 %v257
  %v293 = vpop.f32.mrf.mxu0
  %v294 = vadd.f32 0.0, %v293
  %v295 = vpop.f32.mrf.mxu0
  %v296 = vpop.f32.mrf.mxu0
  %v297 = vpop.f32.mrf.mxu0
  %298 = vdwg.mxu0
  %299 = vmatprep.subr.bf16.mxu0 0
  %300 = vmatpush1.bf16.msra.mxu0 0
  %301 = vmatprep.subr.bf16.mxu0 0
  %302 = vmatpush1.bf16.msra.mxu0 0
  %303 = vmatprep.subr.bf16.mxu0 0
  %304 = vmatpush1.bf16.msra.mxu0 0
  %305 = vmatprep.subr.bf16.mxu0 0
  %306 = vmatpush1.bf16.msra.mxu0 0
  %307 = vmatprep.subr.bf16.mxu0 0
  %308 = vmatpush1.bf16.msra.mxu0 %v139
  %309 = vmatprep.subr.bf16.mxu0 0
  %310 = vmatpush1.bf16.msra.mxu0 %v138
  %311 = vmatprep.subr.bf16.mxu0 0
  %312 = vmatpush1.bf16.msra.mxu0 %v137
  %313 = vmatprep.subr.bf16.mxu0 0
  %314 = vmatpush1.bf16.msra.mxu0 %v136
  %315 = vmatprep.subr.bf16.mxu0 0
  %316 = vmatpush2.bf16.msra.mxu0 0
  %317 = vmatprep.subr.bf16.mxu0 0
  %318 = vmatpush2.bf16.msra.mxu0 0
  %319 = vmatprep.subr.bf16.mxu0 0
  %320 = vmatpush2.bf16.msra.mxu0 0
  %321 = vmatprep.subr.bf16.mxu0 0
  %322 = vmatpush2.bf16.msra.mxu0 0
  %323 = vmatprep.subr.bf16.mxu0 0
  %324 = vmatpush2.bf16.msra.mxu0 0
  %325 = vmatprep.subr.bf16.mxu0 0
  %326 = vmatpush2.bf16.msra.mxu0 0
  %327 = vmatprep.subr.bf16.mxu0 0
  %328 = vmatpush2.bf16.msra.mxu0 0
  %329 = vmatprep.subr.bf16.mxu0 0
  %330 = vmatpush2.bf16.msra.mxu0 0
  %331 = vmatprep.mubr.bf16.mxu0 0
  %332 = vmatmul.mubr.bf16.gmra.mxu0 %v257
  %v333 = vpop.f32.mrf.mxu0
  %v334 = vadd.f32 %v294, %v333
  %v335 = vpop.f32.mrf.mxu0
  %v336 = vpop.f32.mrf.mxu0
  %v337 = vpop.f32.mrf.mxu0
  %338 = vdwg.mxu0
  %339 = vmatprep.subr.bf16.mxu0 0
  %340 = vmatpush1.bf16.msra.mxu0 0
  %341 = vmatprep.subr.bf16.mxu0 0
  %342 = vmatpush1.bf16.msra.mxu0 0
  %343 = vmatprep.subr.bf16.mxu0 0
  %344 = vmatpush1.bf16.msra.mxu0 0
  %345 = vmatprep.subr.bf16.mxu0 0
  %346 = vmatpush1.bf16.msra.mxu0 0
  %347 = vmatprep.subr.bf16.mxu0 0
  %348 = vmatpush1.bf16.msra.mxu0 %v203
  %349 = vmatprep.subr.bf16.mxu0 0
  %350 = vmatpush1.bf16.msra.mxu0 %v202
  %351 = vmatprep.subr.bf16.mxu0 0
  %352 = vmatpush1.bf16.msra.mxu0 %v201
  %353 = vmatprep.subr.bf16.mxu0 0
  %354 = vmatpush1.bf16.msra.mxu0 %v200
  %355 = vmatprep.subr.bf16.mxu0 0
  %356 = vmatpush2.bf16.msra.mxu0 0
  %357 = vmatprep.subr.bf16.mxu0 0
  %358 = vmatpush2.bf16.msra.mxu0 0
  %359 = vmatprep.subr.bf16.mxu0 0
  %360 = vmatpush2.bf16.msra.mxu0 0
  %361 = vmatprep.subr.bf16.mxu0 0
  %362 = vmatpush2.bf16.msra.mxu0 0
  %363 = vmatprep.subr.bf16.mxu0 0
  %364 = vmatpush2.bf16.msra.mxu0 0
  %365 = vmatprep.subr.bf16.mxu0 0
  %366 = vmatpush2.bf16.msra.mxu0 0
  %367 = vmatprep.subr.bf16.mxu0 0
  %368 = vmatpush2.bf16.msra.mxu0 0
  %369 = vmatprep.subr.bf16.mxu0 0
  %370 = vmatpush2.bf16.msra.mxu0 0
  %371 = vmatprep.mubr.bf16.mxu0 0
  %372 = vmatmul.mubr.bf16.gmra.mxu0 %v257
  %v373 = vpop.f32.mrf.mxu0
  %v374 = vadd.f32 0.0, %v373
  %v375 = vpop.f32.mrf.mxu0
  %v376 = vpop.f32.mrf.mxu0
  %v377 = vpop.f32.mrf.mxu0
  %378 = vdwg.mxu0
  %v379 = vadd.f32 %v334, %v374
  %380 = vset.pattern.permute.xlu0 2
  %381 = vperm.xlu0 %380, %v44
  %v382 = vpop.permute.xlu0 %381
  %vm383 = vcmp.eq.s32.totalorder %v43, %v382
  %v384 = vsel %vm383, 1, 0
  %v385 = vcvt.s32.f32 %v384
  %v386 = vpack.c.bf16 %v385, %v385
  %v388 = vsel %vm76, %v386, 0
  %390 = vmatprep.subr.bf16.mxu0 0
  %391 = vmatpush1.bf16.msra.mxu0 0
  %392 = vmatprep.subr.bf16.mxu0 0
  %393 = vmatpush1.bf16.msra.mxu0 0
  %394 = vmatprep.subr.bf16.mxu0 0
  %395 = vmatpush1.bf16.msra.mxu0 0
  %396 = vmatprep.subr.bf16.mxu0 0
  %397 = vmatpush1.bf16.msra.mxu0 0
  %398 = vmatprep.subr.bf16.mxu0 0
  %399 = vmatpush1.bf16.msra.mxu0 %v71
  %400 = vmatprep.subr.bf16.mxu0 0
  %401 = vmatpush1.bf16.msra.mxu0 %v70
  %402 = vmatprep.subr.bf16.mxu0 0
  %403 = vmatpush1.bf16.msra.mxu0 %v69
  %404 = vmatprep.subr.bf16.mxu0 0
  %405 = vmatpush1.bf16.msra.mxu0 %v68
  %406 = vmatprep.subr.bf16.mxu0 0
  %407 = vmatpush2.bf16.msra.mxu0 0
  %408 = vmatprep.subr.bf16.mxu0 0
  %409 = vmatpush2.bf16.msra.mxu0 0
  %410 = vmatprep.subr.bf16.mxu0 0
  %411 = vmatpush2.bf16.msra.mxu0 0
  %412 = vmatprep.subr.bf16.mxu0 0
  %413 = vmatpush2.bf16.msra.mxu0 0
  %414 = vmatprep.subr.bf16.mxu0 0
  %415 = vmatpush2.bf16.msra.mxu0 0
  %416 = vmatprep.subr.bf16.mxu0 0
  %417 = vmatpush2.bf16.msra.mxu0 0
  %418 = vmatprep.subr.bf16.mxu0 0
  %419 = vmatpush2.bf16.msra.mxu0 0
  %420 = vmatprep.subr.bf16.mxu0 0
  %421 = vmatpush2.bf16.msra.mxu0 0
  %422 = vmatprep.mubr.bf16.mxu0 0
  %423 = vmatmul.mubr.bf16.gmra.mxu0 %v388
  %v424 = vpop.f32.mrf.mxu0
  %v425 = vadd.f32 0.0, %v424
  %v426 = vpop.f32.mrf.mxu0
  %v427 = vpop.f32.mrf.mxu0
  %v428 = vpop.f32.mrf.mxu0
  %429 = vdwg.mxu0
  %430 = vmatprep.subr.bf16.mxu0 0
  %431 = vmatpush1.bf16.msra.mxu0 0
  %432 = vmatprep.subr.bf16.mxu0 0
  %433 = vmatpush1.bf16.msra.mxu0 0
  %434 = vmatprep.subr.bf16.mxu0 0
  %435 = vmatpush1.bf16.msra.mxu0 0
  %436 = vmatprep.subr.bf16.mxu0 0
  %437 = vmatpush1.bf16.msra.mxu0 0
  %438 = vmatprep.subr.bf16.mxu0 0
  %439 = vmatpush1.bf16.msra.mxu0 %v139
  %440 = vmatprep.subr.bf16.mxu0 0
  %441 = vmatpush1.bf16.msra.mxu0 %v138
  %442 = vmatprep.subr.bf16.mxu0 0
  %443 = vmatpush1.bf16.msra.mxu0 %v137
  %444 = vmatprep.subr.bf16.mxu0 0
  %445 = vmatpush1.bf16.msra.mxu0 %v136
  %446 = vmatprep.subr.bf16.mxu0 0
  %447 = vmatpush2.bf16.msra.mxu0 0
  %448 = vmatprep.subr.bf16.mxu0 0
  %449 = vmatpush2.bf16.msra.mxu0 0
  %450 = vmatprep.subr.bf16.mxu0 0
  %451 = vmatpush2.bf16.msra.mxu0 0
  %452 = vmatprep.subr.bf16.mxu0 0
  %453 = vmatpush2.bf16.msra.mxu0 0
  %454 = vmatprep.subr.bf16.mxu0 0
  %455 = vmatpush2.bf16.msra.mxu0 0
  %456 = vmatprep.subr.bf16.mxu0 0
  %457 = vmatpush2.bf16.msra.mxu0 0
  %458 = vmatprep.subr.bf16.mxu0 0
  %459 = vmatpush2.bf16.msra.mxu0 0
  %460 = vmatprep.subr.bf16.mxu0 0
  %461 = vmatpush2.bf16.msra.mxu0 0
  %462 = vmatprep.mubr.bf16.mxu0 0
  %463 = vmatmul.mubr.bf16.gmra.mxu0 %v388
  %v464 = vpop.f32.mrf.mxu0
  %v465 = vadd.f32 %v425, %v464
  %v466 = vpop.f32.mrf.mxu0
  %v467 = vpop.f32.mrf.mxu0
  %v468 = vpop.f32.mrf.mxu0
  %469 = vdwg.mxu0
  %470 = vmatprep.subr.bf16.mxu0 0
  %471 = vmatpush1.bf16.msra.mxu0 0
  %472 = vmatprep.subr.bf16.mxu0 0
  %473 = vmatpush1.bf16.msra.mxu0 0
  %474 = vmatprep.subr.bf16.mxu0 0
  %475 = vmatpush1.bf16.msra.mxu0 0
  %476 = vmatprep.subr.bf16.mxu0 0
  %477 = vmatpush1.bf16.msra.mxu0 0
  %478 = vmatprep.subr.bf16.mxu0 0
  %479 = vmatpush1.bf16.msra.mxu0 %v203
  %480 = vmatprep.subr.bf16.mxu0 0
  %481 = vmatpush1.bf16.msra.mxu0 %v202
  %482 = vmatprep.subr.bf16.mxu0 0
  %483 = vmatpush1.bf16.msra.mxu0 %v201
  %484 = vmatprep.subr.bf16.mxu0 0
  %485 = vmatpush1.bf16.msra.mxu0 %v200
  %486 = vmatprep.subr.bf16.mxu0 0
  %487 = vmatpush2.bf16.msra.mxu0 0
  %488 = vmatprep.subr.bf16.mxu0 0
  %489 = vmatpush2.bf16.msra.mxu0 0
  %490 = vmatprep.subr.bf16.mxu0 0
  %491 = vmatpush2.bf16.msra.mxu0 0
  %492 = vmatprep.subr.bf16.mxu0 0
  %493 = vmatpush2.bf16.msra.mxu0 0
  %494 = vmatprep.subr.bf16.mxu0 0
  %495 = vmatpush2.bf16.msra.mxu0 0
  %496 = vmatprep.subr.bf16.mxu0 0
  %497 = vmatpush2.bf16.msra.mxu0 0
  %498 = vmatprep.subr.bf16.mxu0 0
  %499 = vmatpush2.bf16.msra.mxu0 0
  %500 = vmatprep.subr.bf16.mxu0 0
  %501 = vmatpush2.bf16.msra.mxu0 0
  %502 = vmatprep.mubr.bf16.mxu0 0
  %503 = vmatmul.mubr.bf16.gmra.mxu0 %v388
  %v504 = vpop.f32.mrf.mxu0
  %v505 = vadd.f32 0.0, %v504
  %v506 = vpop.f32.mrf.mxu0
  %v507 = vpop.f32.mrf.mxu0
  %v508 = vpop.f32.mrf.mxu0
  %509 = vdwg.mxu0
  %v510 = vadd.f32 %v465, %v505
  %511 = vset.pattern.permute.xlu0 3
  %512 = vperm.xlu0 %511, %v44
  %v513 = vpop.permute.xlu0 %512
  %vm514 = vcmp.eq.s32.totalorder %v43, %v513
  %v515 = vsel %vm514, 1, 0
  %v516 = vcvt.s32.f32 %v515
  %v517 = vpack.c.bf16 %v516, %v516
  %v519 = vsel %vm76, %v517, 0
  %521 = vmatprep.subr.bf16.mxu0 0
  %522 = vmatpush1.bf16.msra.mxu0 0
  %523 = vmatprep.subr.bf16.mxu0 0
  %524 = vmatpush1.bf16.msra.mxu0 0
  %525 = vmatprep.subr.bf16.mxu0 0
  %526 = vmatpush1.bf16.msra.mxu0 0
  %527 = vmatprep.subr.bf16.mxu0 0
  %528 = vmatpush1.bf16.msra.mxu0 0
  %529 = vmatprep.subr.bf16.mxu0 0
  %530 = vmatpush1.bf16.msra.mxu0 %v71
  %531 = vmatprep.subr.bf16.mxu0 0
  %532 = vmatpush1.bf16.msra.mxu0 %v70
  %533 = vmatprep.subr.bf16.mxu0 0
  %534 = vmatpush1.bf16.msra.mxu0 %v69
  %535 = vmatprep.subr.bf16.mxu0 0
  %536 = vmatpush1.bf16.msra.mxu0 %v68
  %537 = vmatprep.subr.bf16.mxu0 0
  %538 = vmatpush2.bf16.msra.mxu0 0
  %539 = vmatprep.subr.bf16.mxu0 0
  %540 = vmatpush2.bf16.msra.mxu0 0
  %541 = vmatprep.subr.bf16.mxu0 0
  %542 = vmatpush2.bf16.msra.mxu0 0
  %543 = vmatprep.subr.bf16.mxu0 0
  %544 = vmatpush2.bf16.msra.mxu0 0
  %545 = vmatprep.subr.bf16.mxu0 0
  %546 = vmatpush2.bf16.msra.mxu0 0
  %547 = vmatprep.subr.bf16.mxu0 0
  %548 = vmatpush2.bf16.msra.mxu0 0
  %549 = vmatprep.subr.bf16.mxu0 0
  %550 = vmatpush2.bf16.msra.mxu0 0
  %551 = vmatprep.subr.bf16.mxu0 0
  %552 = vmatpush2.bf16.msra.mxu0 0
  %553 = vmatprep.mubr.bf16.mxu0 0
  %554 = vmatmul.mubr.bf16.gmra.mxu0 %v519
  %v555 = vpop.f32.mrf.mxu0
  %v556 = vadd.f32 0.0, %v555
  %v557 = vpop.f32.mrf.mxu0
  %v558 = vpop.f32.mrf.mxu0
  %v559 = vpop.f32.mrf.mxu0
  %560 = vdwg.mxu0
  %561 = vmatprep.subr.bf16.mxu0 0
  %562 = vmatpush1.bf16.msra.mxu0 0
  %563 = vmatprep.subr.bf16.mxu0 0
  %564 = vmatpush1.bf16.msra.mxu0 0
  %565 = vmatprep.subr.bf16.mxu0 0
  %566 = vmatpush1.bf16.msra.mxu0 0
  %567 = vmatprep.subr.bf16.mxu0 0
  %568 = vmatpush1.bf16.msra.mxu0 0
  %569 = vmatprep.subr.bf16.mxu0 0
  %570 = vmatpush1.bf16.msra.mxu0 %v139
  %571 = vmatprep.subr.bf16.mxu0 0
  %572 = vmatpush1.bf16.msra.mxu0 %v138
  %573 = vmatprep.subr.bf16.mxu0 0
  %574 = vmatpush1.bf16.msra.mxu0 %v137
  %575 = vmatprep.subr.bf16.mxu0 0
  %576 = vmatpush1.bf16.msra.mxu0 %v136
  %577 = vmatprep.subr.bf16.mxu0 0
  %578 = vmatpush2.bf16.msra.mxu0 0
  %579 = vmatprep.subr.bf16.mxu0 0
  %580 = vmatpush2.bf16.msra.mxu0 0
  %581 = vmatprep.subr.bf16.mxu0 0
  %582 = vmatpush2.bf16.msra.mxu0 0
  %583 = vmatprep.subr.bf16.mxu0 0
  %584 = vmatpush2.bf16.msra.mxu0 0
  %585 = vmatprep.subr.bf16.mxu0 0
  %586 = vmatpush2.bf16.msra.mxu0 0
  %587 = vmatprep.subr.bf16.mxu0 0
  %588 = vmatpush2.bf16.msra.mxu0 0
  %589 = vmatprep.subr.bf16.mxu0 0
  %590 = vmatpush2.bf16.msra.mxu0 0
  %591 = vmatprep.subr.bf16.mxu0 0
  %592 = vmatpush2.bf16.msra.mxu0 0
  %593 = vmatprep.mubr.bf16.mxu0 0
  %594 = vmatmul.mubr.bf16.gmra.mxu0 %v519
  %v595 = vpop.f32.mrf.mxu0
  %v596 = vadd.f32 %v556, %v595
  %v597 = vpop.f32.mrf.mxu0
  %v598 = vpop.f32.mrf.mxu0
  %v599 = vpop.f32.mrf.mxu0
  %600 = vdwg.mxu0
  %601 = vmatprep.subr.bf16.mxu0 0
  %602 = vmatpush1.bf16.msra.mxu0 0
  %603 = vmatprep.subr.bf16.mxu0 0
  %604 = vmatpush1.bf16.msra.mxu0 0
  %605 = vmatprep.subr.bf16.mxu0 0
  %606 = vmatpush1.bf16.msra.mxu0 0
  %607 = vmatprep.subr.bf16.mxu0 0
  %608 = vmatpush1.bf16.msra.mxu0 0
  %609 = vmatprep.subr.bf16.mxu0 0
  %610 = vmatpush1.bf16.msra.mxu0 %v203
  %611 = vmatprep.subr.bf16.mxu0 0
  %612 = vmatpush1.bf16.msra.mxu0 %v202
  %613 = vmatprep.subr.bf16.mxu0 0
  %614 = vmatpush1.bf16.msra.mxu0 %v201
  %615 = vmatprep.subr.bf16.mxu0 0
  %616 = vmatpush1.bf16.msra.mxu0 %v200
  %617 = vmatprep.subr.bf16.mxu0 0
  %618 = vmatpush2.bf16.msra.mxu0 0
  %619 = vmatprep.subr.bf16.mxu0 0
  %620 = vmatpush2.bf16.msra.mxu0 0
  %621 = vmatprep.subr.bf16.mxu0 0
  %622 = vmatpush2.bf16.msra.mxu0 0
  %623 = vmatprep.subr.bf16.mxu0 0
  %624 = vmatpush2.bf16.msra.mxu0 0
  %625 = vmatprep.subr.bf16.mxu0 0
  %626 = vmatpush2.bf16.msra.mxu0 0
  %627 = vmatprep.subr.bf16.mxu0 0
  %628 = vmatpush2.bf16.msra.mxu0 0
  %629 = vmatprep.subr.bf16.mxu0 0
  %630 = vmatpush2.bf16.msra.mxu0 0
  %631 = vmatprep.subr.bf16.mxu0 0
  %632 = vmatpush2.bf16.msra.mxu0 0
  %633 = vmatprep.mubr.bf16.mxu0 0
  %634 = vmatmul.mubr.bf16.gmra.mxu0 %v519
  %v635 = vpop.f32.mrf.mxu0
  %v636 = vadd.f32 0.0, %v635
  %v637 = vpop.f32.mrf.mxu0
  %v638 = vpop.f32.mrf.mxu0
  %v639 = vpop.f32.mrf.mxu0
  %640 = vdwg.mxu0
  %v641 = vadd.f32 %v596, %v636
  %642 = vset.pattern.permute.xlu0 4
  %643 = vperm.xlu0 %642, %v44
  %v644 = vpop.permute.xlu0 %643
  %vm645 = vcmp.eq.s32.totalorder %v43, %v644
  %v646 = vsel %vm645, 1, 0
  %v647 = vcvt.s32.f32 %v646
  %v648 = vpack.c.bf16 %v647, %v647
  %v650 = vsel %vm76, %v648, 0
  %652 = vmatprep.subr.bf16.mxu0 0
  %653 = vmatpush1.bf16.msra.mxu0 0
  %654 = vmatprep.subr.bf16.mxu0 0
  %655 = vmatpush1.bf16.msra.mxu0 0
  %656 = vmatprep.subr.bf16.mxu0 0
  %657 = vmatpush1.bf16.msra.mxu0 0
  %658 = vmatprep.subr.bf16.mxu0 0
  %659 = vmatpush1.bf16.msra.mxu0 0
  %660 = vmatprep.subr.bf16.mxu0 0
  %661 = vmatpush1.bf16.msra.mxu0 %v71
  %662 = vmatprep.subr.bf16.mxu0 0
  %663 = vmatpush1.bf16.msra.mxu0 %v70
  %664 = vmatprep.subr.bf16.mxu0 0
  %665 = vmatpush1.bf16.msra.mxu0 %v69
  %666 = vmatprep.subr.bf16.mxu0 0
  %667 = vmatpush1.bf16.msra.mxu0 %v68
  %668 = vmatprep.subr.bf16.mxu0 0
  %669 = vmatpush2.bf16.msra.mxu0 0
  %670 = vmatprep.subr.bf16.mxu0 0
  %671 = vmatpush2.bf16.msra.mxu0 0
  %672 = vmatprep.subr.bf16.mxu0 0
  %673 = vmatpush2.bf16.msra.mxu0 0
  %674 = vmatprep.subr.bf16.mxu0 0
  %675 = vmatpush2.bf16.msra.mxu0 0
  %676 = vmatprep.subr.bf16.mxu0 0
  %677 = vmatpush2.bf16.msra.mxu0 0
  %678 = vmatprep.subr.bf16.mxu0 0
  %679 = vmatpush2.bf16.msra.mxu0 0
  %680 = vmatprep.subr.bf16.mxu0 0
  %681 = vmatpush2.bf16.msra.mxu0 0
  %682 = vmatprep.subr.bf16.mxu0 0
  %683 = vmatpush2.bf16.msra.mxu0 0
  %684 = vmatprep.mubr.bf16.mxu0 0
  %685 = vmatmul.mubr.bf16.gmra.mxu0 %v650
  %v686 = vpop.f32.mrf.mxu0
  %v687 = vadd.f32 0.0, %v686
  %v688 = vpop.f32.mrf.mxu0
  %v689 = vpop.f32.mrf.mxu0
  %v690 = vpop.f32.mrf.mxu0
  %691 = vdwg.mxu0
  %692 = vmatprep.subr.bf16.mxu0 0
  %693 = vmatpush1.bf16.msra.mxu0 0
  %694 = vmatprep.subr.bf16.mxu0 0
  %695 = vmatpush1.bf16.msra.mxu0 0
  %696 = vmatprep.subr.bf16.mxu0 0
  %697 = vmatpush1.bf16.msra.mxu0 0
  %698 = vmatprep.subr.bf16.mxu0 0
  %699 = vmatpush1.bf16.msra.mxu0 0
  %700 = vmatprep.subr.bf16.mxu0 0
  %701 = vmatpush1.bf16.msra.mxu0 %v139
  %702 = vmatprep.subr.bf16.mxu0 0
  %703 = vmatpush1.bf16.msra.mxu0 %v138
  %704 = vmatprep.subr.bf16.mxu0 0
  %705 = vmatpush1.bf16.msra.mxu0 %v137
  %706 = vmatprep.subr.bf16.mxu0 0
  %707 = vmatpush1.bf16.msra.mxu0 %v136
  %708 = vmatprep.subr.bf16.mxu0 0
  %709 = vmatpush2.bf16.msra.mxu0 0
  %710 = vmatprep.subr.bf16.mxu0 0
  %711 = vmatpush2.bf16.msra.mxu0 0
  %712 = vmatprep.subr.bf16.mxu0 0
  %713 = vmatpush2.bf16.msra.mxu0 0
  %714 = vmatprep.subr.bf16.mxu0 0
  %715 = vmatpush2.bf16.msra.mxu0 0
  %716 = vmatprep.subr.bf16.mxu0 0
  %717 = vmatpush2.bf16.msra.mxu0 0
  %718 = vmatprep.subr.bf16.mxu0 0
  %719 = vmatpush2.bf16.msra.mxu0 0
  %720 = vmatprep.subr.bf16.mxu0 0
  %721 = vmatpush2.bf16.msra.mxu0 0
  %722 = vmatprep.subr.bf16.mxu0 0
  %723 = vmatpush2.bf16.msra.mxu0 0
  %724 = vmatprep.mubr.bf16.mxu0 0
  %725 = vmatmul.mubr.bf16.gmra.mxu0 %v650
  %v726 = vpop.f32.mrf.mxu0
  %v727 = vadd.f32 %v687, %v726
  %v728 = vpop.f32.mrf.mxu0
  %v729 = vpop.f32.mrf.mxu0
  %v730 = vpop.f32.mrf.mxu0
  %731 = vdwg.mxu0
  %732 = vmatprep.subr.bf16.mxu0 0
  %733 = vmatpush1.bf16.msra.mxu0 0
  %734 = vmatprep.subr.bf16.mxu0 0
  %735 = vmatpush1.bf16.msra.mxu0 0
  %736 = vmatprep.subr.bf16.mxu0 0
  %737 = vmatpush1.bf16.msra.mxu0 0
  %738 = vmatprep.subr.bf16.mxu0 0
  %739 = vmatpush1.bf16.msra.mxu0 0
  %740 = vmatprep.subr.bf16.mxu0 0
  %741 = vmatpush1.bf16.msra.mxu0 %v203
  %742 = vmatprep.subr.bf16.mxu0 0
  %743 = vmatpush1.bf16.msra.mxu0 %v202
  %744 = vmatprep.subr.bf16.mxu0 0
  %745 = vmatpush1.bf16.msra.mxu0 %v201
  %746 = vmatprep.subr.bf16.mxu0 0
  %747 = vmatpush1.bf16.msra.mxu0 %v200
  %748 = vmatprep.subr.bf16.mxu0 0
  %749 = vmatpush2.bf16.msra.mxu0 0
  %750 = vmatprep.subr.bf16.mxu0 0
  %751 = vmatpush2.bf16.msra.mxu0 0
  %752 = vmatprep.subr.bf16.mxu0 0
  %753 = vmatpush2.bf16.msra.mxu0 0
  %754 = vmatprep.subr.bf16.mxu0 0
  %755 = vmatpush2.bf16.msra.mxu0 0
  %756 = vmatprep.subr.bf16.mxu0 0
  %757 = vmatpush2.bf16.msra.mxu0 0
  %758 = vmatprep.subr.bf16.mxu0 0
  %759 = vmatpush2.bf16.msra.mxu0 0
  %760 = vmatprep.subr.bf16.mxu0 0
  %761 = vmatpush2.bf16.msra.mxu0 0
  %762 = vmatprep.subr.bf16.mxu0 0
  %763 = vmatpush2.bf16.msra.mxu0 0
  %764 = vmatprep.mubr.bf16.mxu0 0
  %765 = vmatmul.mubr.bf16.gmra.mxu0 %v650
  %v766 = vpop.f32.mrf.mxu0
  %v767 = vadd.f32 0.0, %v766
  %v768 = vpop.f32.mrf.mxu0
  %v769 = vpop.f32.mrf.mxu0
  %v770 = vpop.f32.mrf.mxu0
  %771 = vdwg.mxu0
  %v772 = vadd.f32 %v727, %v767
  %773 = vset.pattern.permute.xlu0 5
  %774 = vperm.xlu0 %773, %v44
  %v775 = vpop.permute.xlu0 %774
  %vm776 = vcmp.eq.s32.totalorder %v43, %v775
  %v777 = vsel %vm776, 1, 0
  %v778 = vcvt.s32.f32 %v777
  %v779 = vpack.c.bf16 %v778, %v778
  %v781 = vsel %vm76, %v779, 0
  %783 = vmatprep.subr.bf16.mxu0 0
  %784 = vmatpush1.bf16.msra.mxu0 0
  %785 = vmatprep.subr.bf16.mxu0 0
  %786 = vmatpush1.bf16.msra.mxu0 0
  %787 = vmatprep.subr.bf16.mxu0 0
  %788 = vmatpush1.bf16.msra.mxu0 0
  %789 = vmatprep.subr.bf16.mxu0 0
  %790 = vmatpush1.bf16.msra.mxu0 0
  %791 = vmatprep.subr.bf16.mxu0 0
  %792 = vmatpush1.bf16.msra.mxu0 %v71
  %793 = vmatprep.subr.bf16.mxu0 0
  %794 = vmatpush1.bf16.msra.mxu0 %v70
  %795 = vmatprep.subr.bf16.mxu0 0
  %796 = vmatpush1.bf16.msra.mxu0 %v69
  %797 = vmatprep.subr.bf16.mxu0 0
  %798 = vmatpush1.bf16.msra.mxu0 %v68
  %799 = vmatprep.subr.bf16.mxu0 0
  %800 = vmatpush2.bf16.msra.mxu0 0
  %801 = vmatprep.subr.bf16.mxu0 0
  %802 = vmatpush2.bf16.msra.mxu0 0
  %803 = vmatprep.subr.bf16.mxu0 0
  %804 = vmatpush2.bf16.msra.mxu0 0
  %805 = vmatprep.subr.bf16.mxu0 0
  %806 = vmatpush2.bf16.msra.mxu0 0
  %807 = vmatprep.subr.bf16.mxu0 0
  %808 = vmatpush2.bf16.msra.mxu0 0
  %809 = vmatprep.subr.bf16.mxu0 0
  %810 = vmatpush2.bf16.msra.mxu0 0
  %811 = vmatprep.subr.bf16.mxu0 0
  %812 = vmatpush2.bf16.msra.mxu0 0
  %813 = vmatprep.subr.bf16.mxu0 0
  %814 = vmatpush2.bf16.msra.mxu0 0
  %815 = vmatprep.mubr.bf16.mxu0 0
  %816 = vmatmul.mubr.bf16.gmra.mxu0 %v781
  %v817 = vpop.f32.mrf.mxu0
  %v818 = vadd.f32 0.0, %v817
  %v819 = vpop.f32.mrf.mxu0
  %v820 = vpop.f32.mrf.mxu0
  %v821 = vpop.f32.mrf.mxu0
  %822 = vdwg.mxu0
  %823 = vmatprep.subr.bf16.mxu0 0
  %824 = vmatpush1.bf16.msra.mxu0 0
  %825 = vmatprep.subr.bf16.mxu0 0
  %826 = vmatpush1.bf16.msra.mxu0 0
  %827 = vmatprep.subr.bf16.mxu0 0
  %828 = vmatpush1.bf16.msra.mxu0 0
  %829 = vmatprep.subr.bf16.mxu0 0
  %830 = vmatpush1.bf16.msra.mxu0 0
  %831 = vmatprep.subr.bf16.mxu0 0
  %832 = vmatpush1.bf16.msra.mxu0 %v139
  %833 = vmatprep.subr.bf16.mxu0 0
  %834 = vmatpush1.bf16.msra.mxu0 %v138
  %835 = vmatprep.subr.bf16.mxu0 0
  %836 = vmatpush1.bf16.msra.mxu0 %v137
  %837 = vmatprep.subr.bf16.mxu0 0
  %838 = vmatpush1.bf16.msra.mxu0 %v136
  %839 = vmatprep.subr.bf16.mxu0 0
  %840 = vmatpush2.bf16.msra.mxu0 0
  %841 = vmatprep.subr.bf16.mxu0 0
  %842 = vmatpush2.bf16.msra.mxu0 0
  %843 = vmatprep.subr.bf16.mxu0 0
  %844 = vmatpush2.bf16.msra.mxu0 0
  %845 = vmatprep.subr.bf16.mxu0 0
  %846 = vmatpush2.bf16.msra.mxu0 0
  %847 = vmatprep.subr.bf16.mxu0 0
  %848 = vmatpush2.bf16.msra.mxu0 0
  %849 = vmatprep.subr.bf16.mxu0 0
  %850 = vmatpush2.bf16.msra.mxu0 0
  %851 = vmatprep.subr.bf16.mxu0 0
  %852 = vmatpush2.bf16.msra.mxu0 0
  %853 = vmatprep.subr.bf16.mxu0 0
  %854 = vmatpush2.bf16.msra.mxu0 0
  %855 = vmatprep.mubr.bf16.mxu0 0
  %856 = vmatmul.mubr.bf16.gmra.mxu0 %v781
  %v857 = vpop.f32.mrf.mxu0
  %v858 = vadd.f32 %v818, %v857
  %v859 = vpop.f32.mrf.mxu0
  %v860 = vpop.f32.mrf.mxu0
  %v861 = vpop.f32.mrf.mxu0
  %862 = vdwg.mxu0
  %863 = vmatprep.subr.bf16.mxu0 0
  %864 = vmatpush1.bf16.msra.mxu0 0
  %865 = vmatprep.subr.bf16.mxu0 0
  %866 = vmatpush1.bf16.msra.mxu0 0
  %867 = vmatprep.subr.bf16.mxu0 0
  %868 = vmatpush1.bf16.msra.mxu0 0
  %869 = vmatprep.subr.bf16.mxu0 0
  %870 = vmatpush1.bf16.msra.mxu0 0
  %871 = vmatprep.subr.bf16.mxu0 0
  %872 = vmatpush1.bf16.msra.mxu0 %v203
  %873 = vmatprep.subr.bf16.mxu0 0
  %874 = vmatpush1.bf16.msra.mxu0 %v202
  %875 = vmatprep.subr.bf16.mxu0 0
  %876 = vmatpush1.bf16.msra.mxu0 %v201
  %877 = vmatprep.subr.bf16.mxu0 0
  %878 = vmatpush1.bf16.msra.mxu0 %v200
  %879 = vmatprep.subr.bf16.mxu0 0
  %880 = vmatpush2.bf16.msra.mxu0 0
  %881 = vmatprep.subr.bf16.mxu0 0
  %882 = vmatpush2.bf16.msra.mxu0 0
  %883 = vmatprep.subr.bf16.mxu0 0
  %884 = vmatpush2.bf16.msra.mxu0 0
  %885 = vmatprep.subr.bf16.mxu0 0
  %886 = vmatpush2.bf16.msra.mxu0 0
  %887 = vmatprep.subr.bf16.mxu0 0
  %888 = vmatpush2.bf16.msra.mxu0 0
  %889 = vmatprep.subr.bf16.mxu0 0
  %890 = vmatpush2.bf16.msra.mxu0 0
  %891 = vmatprep.subr.bf16.mxu0 0
  %892 = vmatpush2.bf16.msra.mxu0 0
  %893 = vmatprep.subr.bf16.mxu0 0
  %894 = vmatpush2.bf16.msra.mxu0 0
  %895 = vmatprep.mubr.bf16.mxu0 0
  %896 = vmatmul.mubr.bf16.gmra.mxu0 %v781
  %v897 = vpop.f32.mrf.mxu0
  %v898 = vadd.f32 0.0, %v897
  %v899 = vpop.f32.mrf.mxu0
  %v900 = vpop.f32.mrf.mxu0
  %v901 = vpop.f32.mrf.mxu0
  %902 = vdwg.mxu0
  %v903 = vadd.f32 %v858, %v898
  %904 = vset.pattern.permute.xlu0 6
  %905 = vperm.xlu0 %904, %v44
  %v906 = vpop.permute.xlu0 %905
  %vm907 = vcmp.eq.s32.totalorder %v43, %v906
  %v908 = vsel %vm907, 1, 0
  %v909 = vcvt.s32.f32 %v908
  %v910 = vpack.c.bf16 %v909, %v909
  %v912 = vsel %vm76, %v910, 0
  %914 = vmatprep.subr.bf16.mxu0 0
  %915 = vmatpush1.bf16.msra.mxu0 0
  %916 = vmatprep.subr.bf16.mxu0 0
  %917 = vmatpush1.bf16.msra.mxu0 0
  %918 = vmatprep.subr.bf16.mxu0 0
  %919 = vmatpush1.bf16.msra.mxu0 0
  %920 = vmatprep.subr.bf16.mxu0 0
  %921 = vmatpush1.bf16.msra.mxu0 0
  %922 = vmatprep.subr.bf16.mxu0 0
  %923 = vmatpush1.bf16.msra.mxu0 %v71
  %924 = vmatprep.subr.bf16.mxu0 0
  %925 = vmatpush1.bf16.msra.mxu0 %v70
  %926 = vmatprep.subr.bf16.mxu0 0
  %927 = vmatpush1.bf16.msra.mxu0 %v69
  %928 = vmatprep.subr.bf16.mxu0 0
  %929 = vmatpush1.bf16.msra.mxu0 %v68
  %930 = vmatprep.subr.bf16.mxu0 0
  %931 = vmatpush2.bf16.msra.mxu0 0
  %932 = vmatprep.subr.bf16.mxu0 0
  %933 = vmatpush2.bf16.msra.mxu0 0
  %934 = vmatprep.subr.bf16.mxu0 0
  %935 = vmatpush2.bf16.msra.mxu0 0
  %936 = vmatprep.subr.bf16.mxu0 0
  %937 = vmatpush2.bf16.msra.mxu0 0
  %938 = vmatprep.subr.bf16.mxu0 0
  %939 = vmatpush2.bf16.msra.mxu0 0
  %940 = vmatprep.subr.bf16.mxu0 0
  %941 = vmatpush2.bf16.msra.mxu0 0
  %942 = vmatprep.subr.bf16.mxu0 0
  %943 = vmatpush2.bf16.msra.mxu0 0
  %944 = vmatprep.subr.bf16.mxu0 0
  %945 = vmatpush2.bf16.msra.mxu0 0
  %946 = vmatprep.mubr.bf16.mxu0 0
  %947 = vmatmul.mubr.bf16.gmra.mxu0 %v912
  %v948 = vpop.f32.mrf.mxu0
  %v949 = vadd.f32 0.0, %v948
  %v950 = vpop.f32.mrf.mxu0
  %v951 = vpop.f32.mrf.mxu0
  %v952 = vpop.f32.mrf.mxu0
  %953 = vdwg.mxu0
  %954 = vmatprep.subr.bf16.mxu0 0
  %955 = vmatpush1.bf16.msra.mxu0 0
  %956 = vmatprep.subr.bf16.mxu0 0
  %957 = vmatpush1.bf16.msra.mxu0 0
  %958 = vmatprep.subr.bf16.mxu0 0
  %959 = vmatpush1.bf16.msra.mxu0 0
  %960 = vmatprep.subr.bf16.mxu0 0
  %961 = vmatpush1.bf16.msra.mxu0 0
  %962 = vmatprep.subr.bf16.mxu0 0
  %963 = vmatpush1.bf16.msra.mxu0 %v139
  %964 = vmatprep.subr.bf16.mxu0 0
  %965 = vmatpush1.bf16.msra.mxu0 %v138
  %966 = vmatprep.subr.bf16.mxu0 0
  %967 = vmatpush1.bf16.msra.mxu0 %v137
  %968 = vmatprep.subr.bf16.mxu0 0
  %969 = vmatpush1.bf16.msra.mxu0 %v136
  %970 = vmatprep.subr.bf16.mxu0 0
  %971 = vmatpush2.bf16.msra.mxu0 0
  %972 = vmatprep.subr.bf16.mxu0 0
  %973 = vmatpush2.bf16.msra.mxu0 0
  %974 = vmatprep.subr.bf16.mxu0 0
  %975 = vmatpush2.bf16.msra.mxu0 0
  %976 = vmatprep.subr.bf16.mxu0 0
  %977 = vmatpush2.bf16.msra.mxu0 0
  %978 = vmatprep.subr.bf16.mxu0 0
  %979 = vmatpush2.bf16.msra.mxu0 0
  %980 = vmatprep.subr.bf16.mxu0 0
  %981 = vmatpush2.bf16.msra.mxu0 0
  %982 = vmatprep.subr.bf16.mxu0 0
  %983 = vmatpush2.bf16.msra.mxu0 0
  %984 = vmatprep.subr.bf16.mxu0 0
  %985 = vmatpush2.bf16.msra.mxu0 0
  %986 = vmatprep.mubr.bf16.mxu0 0
  %987 = vmatmul.mubr.bf16.gmra.mxu0 %v912
  %v988 = vpop.f32.mrf.mxu0
  %v989 = vadd.f32 %v949, %v988
  %v990 = vpop.f32.mrf.mxu0
  %v991 = vpop.f32.mrf.mxu0
  %v992 = vpop.f32.mrf.mxu0
  %993 = vdwg.mxu0
  %994 = vmatprep.subr.bf16.mxu0 0
  %995 = vmatpush1.bf16.msra.mxu0 0
  %996 = vmatprep.subr.bf16.mxu0 0
  %997 = vmatpush1.bf16.msra.mxu0 0
  %998 = vmatprep.subr.bf16.mxu0 0
  %999 = vmatpush1.bf16.msra.mxu0 0
  %1000 = vmatprep.subr.bf16.mxu0 0
  %1001 = vmatpush1.bf16.msra.mxu0 0
  %1002 = vmatprep.subr.bf16.mxu0 0
  %1003 = vmatpush1.bf16.msra.mxu0 %v203
  %1004 = vmatprep.subr.bf16.mxu0 0
  %1005 = vmatpush1.bf16.msra.mxu0 %v202
  %1006 = vmatprep.subr.bf16.mxu0 0
  %1007 = vmatpush1.bf16.msra.mxu0 %v201
  %1008 = vmatprep.subr.bf16.mxu0 0
  %1009 = vmatpush1.bf16.msra.mxu0 %v200
  %1010 = vmatprep.subr.bf16.mxu0 0
  %1011 = vmatpush2.bf16.msra.mxu0 0
  %1012 = vmatprep.subr.bf16.mxu0 0
  %1013 = vmatpush2.bf16.msra.mxu0 0
  %1014 = vmatprep.subr.bf16.mxu0 0
  %1015 = vmatpush2.bf16.msra.mxu0 0
  %1016 = vmatprep.subr.bf16.mxu0 0
  %1017 = vmatpush2.bf16.msra.mxu0 0
  %1018 = vmatprep.subr.bf16.mxu0 0
  %1019 = vmatpush2.bf16.msra.mxu0 0
  %1020 = vmatprep.subr.bf16.mxu0 0
  %1021 = vmatpush2.bf16.msra.mxu0 0
  %1022 = vmatprep.subr.bf16.mxu0 0
  %1023 = vmatpush2.bf16.msra.mxu0 0
  %1024 = vmatprep.subr.bf16.mxu0 0
  %1025 = vmatpush2.bf16.msra.mxu0 0
  %1026 = vmatprep.mubr.bf16.mxu0 0
  %1027 = vmatmul.mubr.bf16.gmra.mxu0 %v912
  %v1028 = vpop.f32.mrf.mxu0
  %v1029 = vadd.f32 0.0, %v1028
  %v1030 = vpop.f32.mrf.mxu0
  %v1031 = vpop.f32.mrf.mxu0
  %v1032 = vpop.f32.mrf.mxu0
  %1033 = vdwg.mxu0
  %v1034 = vadd.f32 %v989, %v1029
  %1035 = vset.pattern.permute.xlu0 7
  %1036 = vperm.xlu0 %1035, %v44
  %v1037 = vpop.permute.xlu0 %1036
  %vm1038 = vcmp.eq.s32.totalorder %v43, %v1037
  %v1039 = vsel %vm1038, 1, 0
  %v1040 = vcvt.s32.f32 %v1039
  %v1041 = vpack.c.bf16 %v1040, %v1040
  %v1043 = vsel %vm76, %v1041, 0
  %1045 = vmatprep.subr.bf16.mxu0 0
  %1046 = vmatpush1.bf16.msra.mxu0 0
  %1047 = vmatprep.subr.bf16.mxu0 0
  %1048 = vmatpush1.bf16.msra.mxu0 0
  %1049 = vmatprep.subr.bf16.mxu0 0
  %1050 = vmatpush1.bf16.msra.mxu0 0
  %1051 = vmatprep.subr.bf16.mxu0 0
  %1052 = vmatpush1.bf16.msra.mxu0 0
  %1053 = vmatprep.subr.bf16.mxu0 0
  %1054 = vmatpush1.bf16.msra.mxu0 %v71
  %1055 = vmatprep.subr.bf16.mxu0 0
  %1056 = vmatpush1.bf16.msra.mxu0 %v70
  %1057 = vmatprep.subr.bf16.mxu0 0
  %1058 = vmatpush1.bf16.msra.mxu0 %v69
  %1059 = vmatprep.subr.bf16.mxu0 0
  %1060 = vmatpush1.bf16.msra.mxu0 %v68
  %1061 = vmatprep.subr.bf16.mxu0 0
  %1062 = vmatpush2.bf16.msra.mxu0 0
  %1063 = vmatprep.subr.bf16.mxu0 0
  %1064 = vmatpush2.bf16.msra.mxu0 0
  %1065 = vmatprep.subr.bf16.mxu0 0
  %1066 = vmatpush2.bf16.msra.mxu0 0
  %1067 = vmatprep.subr.bf16.mxu0 0
  %1068 = vmatpush2.bf16.msra.mxu0 0
  %1069 = vmatprep.subr.bf16.mxu0 0
  %1070 = vmatpush2.bf16.msra.mxu0 0
  %1071 = vmatprep.subr.bf16.mxu0 0
  %1072 = vmatpush2.bf16.msra.mxu0 0
  %1073 = vmatprep.subr.bf16.mxu0 0
  %1074 = vmatpush2.bf16.msra.mxu0 0
  %1075 = vmatprep.subr.bf16.mxu0 0
  %1076 = vmatpush2.bf16.msra.mxu0 0
  %1077 = vmatprep.mubr.bf16.mxu0 0
  %1078 = vmatmul.mubr.bf16.gmra.mxu0 %v1043
  %v1079 = vpop.f32.mrf.mxu0
  %v1080 = vadd.f32 0.0, %v1079
  %v1081 = vpop.f32.mrf.mxu0
  %v1082 = vpop.f32.mrf.mxu0
  %v1083 = vpop.f32.mrf.mxu0
  %1084 = vdwg.mxu0
  %1085 = vmatprep.subr.bf16.mxu0 0
  %1086 = vmatpush1.bf16.msra.mxu0 0
  %1087 = vmatprep.subr.bf16.mxu0 0
  %1088 = vmatpush1.bf16.msra.mxu0 0
  %1089 = vmatprep.subr.bf16.mxu0 0
  %1090 = vmatpush1.bf16.msra.mxu0 0
  %1091 = vmatprep.subr.bf16.mxu0 0
  %1092 = vmatpush1.bf16.msra.mxu0 0
  %1093 = vmatprep.subr.bf16.mxu0 0
  %1094 = vmatpush1.bf16.msra.mxu0 %v139
  %1095 = vmatprep.subr.bf16.mxu0 0
  %1096 = vmatpush1.bf16.msra.mxu0 %v138
  %1097 = vmatprep.subr.bf16.mxu0 0
  %1098 = vmatpush1.bf16.msra.mxu0 %v137
  %1099 = vmatprep.subr.bf16.mxu0 0
  %1100 = vmatpush1.bf16.msra.mxu0 %v136
  %1101 = vmatprep.subr.bf16.mxu0 0
  %1102 = vmatpush2.bf16.msra.mxu0 0
  %1103 = vmatprep.subr.bf16.mxu0 0
  %1104 = vmatpush2.bf16.msra.mxu0 0
  %1105 = vmatprep.subr.bf16.mxu0 0
  %1106 = vmatpush2.bf16.msra.mxu0 0
  %1107 = vmatprep.subr.bf16.mxu0 0
  %1108 = vmatpush2.bf16.msra.mxu0 0
  %1109 = vmatprep.subr.bf16.mxu0 0
  %1110 = vmatpush2.bf16.msra.mxu0 0
  %1111 = vmatprep.subr.bf16.mxu0 0
  %1112 = vmatpush2.bf16.msra.mxu0 0
  %1113 = vmatprep.subr.bf16.mxu0 0
  %1114 = vmatpush2.bf16.msra.mxu0 0
  %1115 = vmatprep.subr.bf16.mxu0 0
  %1116 = vmatpush2.bf16.msra.mxu0 0
  %1117 = vmatprep.mubr.bf16.mxu0 0
  %1118 = vmatmul.mubr.bf16.gmra.mxu0 %v1043
  %v1119 = vpop.f32.mrf.mxu0
  %v1120 = vadd.f32 %v1080, %v1119
  %v1121 = vpop.f32.mrf.mxu0
  %v1122 = vpop.f32.mrf.mxu0
  %v1123 = vpop.f32.mrf.mxu0
  %1124 = vdwg.mxu0
  %1125 = vmatprep.subr.bf16.mxu0 0
  %1126 = vmatpush1.bf16.msra.mxu0 0
  %1127 = vmatprep.subr.bf16.mxu0 0
  %1128 = vmatpush1.bf16.msra.mxu0 0
  %1129 = vmatprep.subr.bf16.mxu0 0
  %1130 = vmatpush1.bf16.msra.mxu0 0
  %1131 = vmatprep.subr.bf16.mxu0 0
  %1132 = vmatpush1.bf16.msra.mxu0 0
  %1133 = vmatprep.subr.bf16.mxu0 0
  %1134 = vmatpush1.bf16.msra.mxu0 %v203
  %1135 = vmatprep.subr.bf16.mxu0 0
  %1136 = vmatpush1.bf16.msra.mxu0 %v202
  %1137 = vmatprep.subr.bf16.mxu0 0
  %1138 = vmatpush1.bf16.msra.mxu0 %v201
  %1139 = vmatprep.subr.bf16.mxu0 0
  %1140 = vmatpush1.bf16.msra.mxu0 %v200
  %1141 = vmatprep.subr.bf16.mxu0 0
  %1142 = vmatpush2.bf16.msra.mxu0 0
  %1143 = vmatprep.subr.bf16.mxu0 0
  %1144 = vmatpush2.bf16.msra.mxu0 0
  %1145 = vmatprep.subr.bf16.mxu0 0
  %1146 = vmatpush2.bf16.msra.mxu0 0
  %1147 = vmatprep.subr.bf16.mxu0 0
  %1148 = vmatpush2.bf16.msra.mxu0 0
  %1149 = vmatprep.subr.bf16.mxu0 0
  %1150 = vmatpush2.bf16.msra.mxu0 0
  %1151 = vmatprep.subr.bf16.mxu0 0
  %1152 = vmatpush2.bf16.msra.mxu0 0
  %1153 = vmatprep.subr.bf16.mxu0 0
  %1154 = vmatpush2.bf16.msra.mxu0 0
  %1155 = vmatprep.subr.bf16.mxu0 0
  %1156 = vmatpush2.bf16.msra.mxu0 0
  %1157 = vmatprep.mubr.bf16.mxu0 0
  %1158 = vmatmul.mubr.bf16.gmra.mxu0 %v1043
  %v1159 = vpop.f32.mrf.mxu0
  %v1160 = vadd.f32 0.0, %v1159
  %v1161 = vpop.f32.mrf.mxu0
  %v1162 = vpop.f32.mrf.mxu0
  %v1163 = vpop.f32.mrf.mxu0
  %1164 = vdwg.mxu0
  %v1165 = vadd.f32 %v1120, %v1160
  %1167 = vrot.lane.b32.xlu0 %v379, 32
  %v1168 = vpop.permute.xlu0 %1167
  %1171 = vrot.lane.b32.xlu0 %v510, 64
  %v1172 = vpop.permute.xlu0 %1171
  %1175 = vrot.lane.b32.xlu0 %v641, 96
  %v1176 = vpop.permute.xlu0 %1175
  %1179 = vrot.lane.b32.xlu0 %v903, 32
  %v1180 = vpop.permute.xlu0 %1179
  %1183 = vrot.lane.b32.xlu0 %v1034, 64
  %v1184 = vpop.permute.xlu0 %1183
  %1187 = vrot.lane.b32.xlu0 %v1165, 96
  %v1188 = vpop.permute.xlu0 %1187
  %vm1190 = vcmask 261120
  %v1191 = vsel %vm1190, %v248, %v1168
  %v1192 = vsel %vm76, %v1191, %v1172
  %vm1193 = vcmask 785408
  %v1194 = vsel %vm1193, %v1192, %v1176
  %v1195 = vsel %vm1190, %v772, %v1180
  %v1196 = vsel %vm76, %v1195, %v1184
  %v1197 = vsel %vm1193, %v1196, %v1188
  %1198 = vst [vmem:[%s4] sm:$0xff] %v1194
  %1199 = vst [vmem:[%s4 + $0x8] sm:$0xff] %v1197
  // Predicated region
  $region18: #{embedding_lookup.1} parent=0 // pred_check
    _
  $region19: #{embedding_lookup.1} parent=0 // pred_check_branch
    %1201 = sbr.rel (0) target = $region21
  $region20: #{embedding_lookup.1} parent=0 // pred_region
    _
  $region21: #{embedding_lookup.1} parent=0 // pred_fallthru
    _
  // Predicated region
  $region22: #{embedding_lookup.1} parent=0 // pred_check
    _
  $region23: #{embedding_lookup.1} parent=0 // pred_check_branch
    %1203 = sbr.rel (0) target = $region25
  $region24: #{embedding_lookup.1} parent=0 // pred_region
    _
  $region25: #{embedding_lookup.1} parent=0 // pred_fallthru
    _

</llo_original>
